<compile_context>
chip_gen: v7x
topology: tpu7x:2x2x1
jax: 0.10.0
libtpu: 0.0.40
codegen_flags: <defaults>
</compile_context>

<pallas_src>
import jax
import jax.numpy as jnp
from jax.experimental import pallas as pl
from jax.experimental.pallas import tpu as pltpu


# ---------------------------------------------------------------------------
# Kernels
# ---------------------------------------------------------------------------

def _rotary_kernel_tiled(x_ref, cos_r_ref, sin_r_ref, cos_c_ref, sin_c_ref, o_ref):
    """Tiled path: x_ref (TM, H); row trig (TM, 1); col trig (1, H); out (TM, 2H)."""
    x = x_ref[...].astype(jnp.float32)
    h = x.shape[-1]
    # torch.cat([sin_x, cos_x], dim=-1) -> two slice stores (no concat intermediate).
    # The second store is lane-aligned when H % 128 == 0 (fast path); otherwise it
    # is a masked store — correct but slower.
    o_ref[:, :h] = (x * cos_r_ref[...] + sin_c_ref[...]).astype(o_ref.dtype)
    o_ref[:, h:] = (x * sin_r_ref[...] + cos_c_ref[...]).astype(o_ref.dtype)


def _rotary_kernel_full(x_ref, cos_r_ref, sin_r_ref, cos_c_ref, sin_c_ref, o_ref):
    """Small-problem path: single step, whole arrays as one block each."""
    x = x_ref[...].astype(jnp.float32)            # (B, M, H)
    h = x.shape[-1]
    # (M,1) broadcasts over batch & lane, (1,H) broadcasts over batch & row.
    o_ref[:, :, :h] = (x * cos_r_ref[...] + sin_c_ref[...]).astype(o_ref.dtype)
    o_ref[:, :, h:] = (x * sin_r_ref[...] + cos_c_ref[...]).astype(o_ref.dtype)


# ---------------------------------------------------------------------------
# Tiling helpers
# ---------------------------------------------------------------------------

def _vmem_budget_bytes() -> int:
    """Scoped-VMEM budget that is safe across v5e / v6e / v7x."""
    try:
        phys = pltpu.get_tpu_info().vmem_capacity_bytes
    except Exception:
        phys = 64 << 20            # conservative fallback: v7x has 64 MiB per TC
    return min(32 << 20, phys // 2)


def _pick_row_tile(m: int, h: int, itemsize: int, target_bytes: int) -> int:
    """Largest row tile that divides m, respects sublane packing for the dtype,
    and keeps the input block near `target_bytes`."""
    sub = max(8, 32 // itemsize)   # 8 (f32) / 16 (bf16) / 32 (int8, fp8) sublanes
    cap = max(sub, min(m, target_bytes // max(1, h * itemsize)))
    t = (cap // sub) * sub
    while t >= sub:
        if m % t == 0:
            return t
        t -= sub
    return m                       # full dimension is always a legal block size


# ---------------------------------------------------------------------------
# Public wrapper
# ---------------------------------------------------------------------------

def rotary_embedding(x: jax.Array, angles: jax.Array, *,
                     small_path_bytes: int = 2 << 20) -> jax.Array:
    """x: (B, M, H) with M == H;  angles: (H,) = (dim//2,);  returns (B, M, 2H)."""
    B, M, H = x.shape
    assert angles.shape == (H,), f"angles must have shape ({H},), got {angles.shape}"
    # The torch module's broadcasting (x * cos_angles[..., None]) requires this.
    assert M == H, "RotaryEmbedding forward requires x.shape[1] == dim // 2"

    # Hoist trig out of the kernel: O(H) XLA work done once, not per grid step.
    ang = angles.astype(jnp.float32)
    cos_a = jnp.cos(ang)
    sin_a = jnp.sin(ang)
    cos_r = cos_a.reshape(M, 1)    # per-row scale layout
    sin_r = sin_a.reshape(M, 1)
    cos_c = cos_a.reshape(1, H)    # per-column bias layout
    sin_c = sin_a.reshape(1, H)

    itemsize = jnp.dtype(x.dtype).itemsize
    out_shape = jax.ShapeDtypeStruct((B, M, 2 * H), x.dtype)

    # Total HBM traffic: read B*M*H, write 2*B*M*H.
    total_bytes = B * M * 3 * H * itemsize
    if total_bytes <= small_path_bytes:
        # Single-step fast path: whole arrays as one block, no pipeline overhead.
        return pl.pallas_call(_rotary_kernel_full, out_shape=out_shape)(
            x, cos_r, sin_r, cos_c, sin_c)

    vmem_budget = _vmem_budget_bytes()
    # Double-buffered in + out blocks: ~2 * (in + 2*in) = 6x the input block,
    # so target the input block at ~budget/8 (leaves slack for the tiny trig inputs).
    target_in = max(1 << 20, vmem_budget // 8)
    TM = _pick_row_tile(M, H, itemsize, target_in)
    num_m = M // TM   # _pick_row_tile only returns divisors of M (or M itself)

    return pl.pallas_call(
        _rotary_kernel_tiled,
        out_shape=out_shape,
        grid_spec=pltpu.PrefetchScalarGridSpec(
            num_scalar_prefetch=0,
            grid=(num_m, B),
            in_specs=[
                # batch dim squeezed -> kernel sees 2-D (TM, H) tiles
                pl.BlockSpec((None, TM, H), lambda m, b: (b, m, 0)),
                pl.BlockSpec((TM, 1), lambda m, b: (m, 0)),
                pl.BlockSpec((TM, 1), lambda m, b: (m, 0)),
                pl.BlockSpec((1, H), lambda m, b: (0, 0)),
                pl.BlockSpec((1, H), lambda m, b: (0, 0)),
            ],
            out_specs=pl.BlockSpec((None, TM, 2 * H), lambda m, b: (b, m, 0)),
        ),
        compiler_params=pltpu.CompilerParams(
            dimension_semantics=("parallel", "parallel"),
            vmem_limit_bytes=vmem_budget,
        ),
    )(x, cos_r, sin_r, cos_c, sin_c)


# ---------------------------------------------------------------------------
# Self-test
# ---------------------------------------------------------------------------

def reference(x, angles):
    """Pure-JAX mirror of the PyTorch forward."""
    sin_a = jnp.sin(angles)
    cos_a = jnp.cos(angles)
    sin_x = x * cos_a[:, None] + sin_a[None, None, :]
    cos_x = x * sin_a[:, None] + cos_a[None, None, :]
    return jnp.concatenate([sin_x, cos_x], axis=-1)


if __name__ == "__main__":
    key = jax.random.PRNGKey(0)
    k1, k2, k3, k4 = jax.random.split(key, 4)

    # Case 1: module-like small shape (dim=64 -> H=32) — exercises the
    # single-step fast path.
    DIM = 64
    H1 = DIM // 2
    B1, M1 = 2, H1
    x1 = jax.random.normal(k1, (B1, M1, H1), dtype=jnp.float32)
    # nn.Parameter init is zeros; use nonzero values so the test is meaningful.
    a1 = jax.random.normal(k2, (H1,), dtype=jnp.float32)
    out1 = jax.block_until_ready(rotary_embedding(x1, a1))
    ref1 = reference(x1, a1)
    assert out1.shape == (B1, M1, 2 * H1)
    assert jnp.allclose(out1, ref1, atol=1e-5, rtol=1e-5), "mismatch (small path)"

    # Case 2: forces the tiled / pipelined path (lane-aligned H = 256).
    H2 = 256
    B2, M2 = 2, H2
    x2 = jax.random.normal(k3, (B2, M2, H2), dtype=jnp.float32)
    a2 = jax.random.normal(k4, (H2,), dtype=jnp.float32)
    out2 = jax.block_until_ready(rotary_embedding(x2, a2, small_path_bytes=0))
    ref2 = reference(x2, a2)
    assert out2.shape == (B2, M2, 2 * H2)
    assert jnp.allclose(out2, ref2, atol=1e-5, rtol=1e-5), "mismatch (tiled path)"

    print("KERNEL_OK")
</pallas_src>

<mosaic_0001>
module attributes {stable_mosaic.version = 11 : i64} {
  func.func @_rotary_kernel_full(%arg0: memref<2x32x32xf32, #tpu.memory_space<vmem>>, %arg1: memref<32x1xf32, #tpu.memory_space<vmem>>, %arg2: memref<32x1xf32, #tpu.memory_space<vmem>>, %arg3: memref<1x32xf32, #tpu.memory_space<vmem>>, %arg4: memref<1x32xf32, #tpu.memory_space<vmem>>, %arg5: memref<2x32x64xf32, #tpu.memory_space<vmem>>) attributes {dimension_semantics = [], scalar_prefetch = 0 : i64, scratch_operands = 0 : i64, tpu.core_type = #tpu.core_type<tc>} {
    %c0 = arith.constant 0 : index
    %c0_0 = arith.constant 0 : index
    %c0_1 = arith.constant 0 : index
    %0 = vector.load %arg0[%c0, %c0_0, %c0_1] : memref<2x32x32xf32, #tpu.memory_space<vmem>>, vector<2x32x32xf32>
    %c0_2 = arith.constant 0 : index
    %c0_3 = arith.constant 0 : index
    %1 = vector.load %arg1[%c0_2, %c0_3] : memref<32x1xf32, #tpu.memory_space<vmem>>, vector<32x1xf32>
    %2 = vector.shape_cast %1 : vector<32x1xf32> to vector<1x32x1xf32>
    %3 = vector.broadcast %2 : vector<1x32x1xf32> to vector<2x32x32xf32>
    %4 = arith.mulf %0, %3 : vector<2x32x32xf32>
    %c0_4 = arith.constant 0 : index
    %c0_5 = arith.constant 0 : index
    %5 = vector.load %arg4[%c0_4, %c0_5] : memref<1x32xf32, #tpu.memory_space<vmem>>, vector<1x32xf32>
    %6 = vector.shape_cast %5 : vector<1x32xf32> to vector<1x1x32xf32>
    %7 = vector.broadcast %6 : vector<1x1x32xf32> to vector<2x32x32xf32>
    %8 = arith.addf %4, %7 : vector<2x32x32xf32>
    %c0_6 = arith.constant 0 : index
    %c0_7 = arith.constant 0 : index
    %c0_8 = arith.constant 0 : index
    %9 = vector.load %arg5[%c0_6, %c0_7, %c0_8] : memref<2x32x64xf32, #tpu.memory_space<vmem>>, vector<2x32x32xf32>
    tpu.vector_store %arg5[%c0_6, %c0_7, %c0_8], %8 {strides = array<i32>} : memref<2x32x64xf32, #tpu.memory_space<vmem>>, vector<2x32x32xf32>,
    %c0_9 = arith.constant 0 : index
    %c0_10 = arith.constant 0 : index
    %10 = vector.load %arg2[%c0_9, %c0_10] : memref<32x1xf32, #tpu.memory_space<vmem>>, vector<32x1xf32>
    %11 = vector.shape_cast %10 : vector<32x1xf32> to vector<1x32x1xf32>
    %12 = vector.broadcast %11 : vector<1x32x1xf32> to vector<2x32x32xf32>
    %13 = arith.mulf %0, %12 : vector<2x32x32xf32>
    %c0_11 = arith.constant 0 : index
    %c0_12 = arith.constant 0 : index
    %14 = vector.load %arg3[%c0_11, %c0_12] : memref<1x32xf32, #tpu.memory_space<vmem>>, vector<1x32xf32>
    %15 = vector.shape_cast %14 : vector<1x32xf32> to vector<1x1x32xf32>
    %16 = vector.broadcast %15 : vector<1x1x32xf32> to vector<2x32x32xf32>
    %17 = arith.addf %13, %16 : vector<2x32x32xf32>
    %c0_13 = arith.constant 0 : index
    %c0_14 = arith.constant 0 : index
    %c32 = arith.constant 32 : index
    %18 = vector.load %arg5[%c0_13, %c0_14, %c32] : memref<2x32x64xf32, #tpu.memory_space<vmem>>, vector<2x32x32xf32>
    tpu.vector_store %arg5[%c0_13, %c0_14, %c32], %17 {strides = array<i32>} : memref<2x32x64xf32, #tpu.memory_space<vmem>>, vector<2x32x32xf32>,
    return
  }
}

</mosaic_0001>

<llo_original>
// kernel: tpu_custom_call.1
$region0: #{tpu_custom_call.1}
  #allocation0 [shape = 'u32[]', space=smem, size = 0x4, offset = 0x4, fixed_abs, tag = 'smem constant byte address 0x4 - core index']
  #allocation1 [shape = 'u32[144,128]{1,0:T(1,128)}', space=vmem, size = 0x12000, scoped, tag = 'internal scratch']
  %s0 = inlined_call_operand.vmem [shape: f32[2,32,32], index: 0, kind: input, shape index: {}]
  %s1 = inlined_call_operand.vmem [shape: f32[32,1], index: 1, kind: input, shape index: {}]
  %s2 = inlined_call_operand.vmem [shape: f32[32,1], index: 2, kind: input, shape index: {}]
  %s3 = inlined_call_operand.vmem [shape: f32[1,32], index: 3, kind: input, shape index: {}]
  %s4 = inlined_call_operand.vmem [shape: f32[1,32], index: 4, kind: input, shape index: {}]
  %s5 = inlined_call_operand.hbm [shape: f32[2,32,64], index: 5, kind: output, shape index: {}]
  %s6 = sld [smem:[#allocation0]]
  $region30: #{tpu_custom_call.1} parent=0
    _
  %s8 = ssub.s32 1, %s6
  %s9 = scalar_select 0, %s8, %s6
  $region1: #{tpu_custom_call.1} parent=0
    #allocation2 [shape = 'u8[32768]{0}', space=vmem, size = 0x8000, scoped, tag = 'output window, operand 0, single buffered']
    #allocation3 [shape = 's32[1]{0}', space=sflag, size = 0x4, scoped, tag = 'scoped memory for tpu_custom_call.1']
    %10 = vsyncpa [#allocation3], 0
    // Predicated region
    $region2: #{tpu_custom_call.1} parent=1 // pred_check
      _
    $region3: #{tpu_custom_call.1} parent=1 // pred_check_branch
      %12 = sbr.rel (0) target = $region5
    $region4: #{tpu_custom_call.1} parent=1 // pred_region
      _
    $region5: #{tpu_custom_call.1} parent=1 // pred_fallthru
      _
    // Predicated region
    $region6: #{tpu_custom_call.1} parent=1 // pred_check
      _
    $region7: #{tpu_custom_call.1} parent=1 // pred_check_branch
      %14 = sbr.rel (0) target = $region9
    $region8: #{tpu_custom_call.1} parent=1 // pred_region
      _
    $region9: #{tpu_custom_call.1} parent=1 // pred_fallthru
      _
    // Predicated region
    $region10: #{tpu_custom_call.1} parent=1 // pred_check
      _
    $region11: #{tpu_custom_call.1} parent=1 // pred_check_branch
      %16 = sbr.rel (0) target = $region13
    $region12: #{tpu_custom_call.1} parent=1 // pred_region
      _
    $region13: #{tpu_custom_call.1} parent=1 // pred_fallthru
      _
    // Predicated region
    $region14: #{tpu_custom_call.1} parent=1 // pred_check
      _
    $region15: #{tpu_custom_call.1} parent=1 // pred_check_branch
      %18 = sbr.rel (0) target = $region17
    $region16: #{tpu_custom_call.1} parent=1 // pred_region
      _
    $region17: #{tpu_custom_call.1} parent=1 // pred_fallthru
      _
    // Predicated region
    $region18: #{tpu_custom_call.1} parent=1 // pred_check
      _
    $region19: #{tpu_custom_call.1} parent=1 // pred_check_branch
      %20 = sbr.rel (0) target = $region21
    $region20: #{tpu_custom_call.1} parent=1 // pred_region
      _
    $region21: #{tpu_custom_call.1} parent=1 // pred_fallthru
      _
    %v21 = vld [vmem:[%s0] sm:$0xff]
    %v22 = vld [vmem:[%s0 + $0x8] sm:$0xff]
    %v23 = vld [vmem:[%s0 + $0x10] sm:$0xff]
    %v24 = vld [vmem:[%s0 + $0x18] sm:$0xff]
    %v25 = vld [vmem:[%s0 + $0x20] sm:$0xff]
    %v26 = vld [vmem:[%s0 + $0x28] sm:$0xff]
    %v27 = vld [vmem:[%s0 + $0x30] sm:$0xff]
    %v28 = vld [vmem:[%s0 + $0x38] sm:$0xff]
    %v29 = vld [vmem:[%s1] sm:$0xff]
    %v30 = vld [vmem:[%s1 + $0x8] sm:$0xff]
    %v31 = vld [vmem:[%s1 + $0x10] sm:$0xff]
    %v32 = vld [vmem:[%s1 + $0x18] sm:$0xff]
    %34 = vset.pattern.permute.xlu0 0
    %35 = vperm.xlu0 %34, %v29
    %v36 = vpop.permute.xlu0 %35
    %39 = vset.pattern.permute.xlu0 0
    %40 = vperm.xlu0 %39, %v30
    %v41 = vpop.permute.xlu0 %40
    %44 = vset.pattern.permute.xlu0 0
    %45 = vperm.xlu0 %44, %v31
    %v46 = vpop.permute.xlu0 %45
    %49 = vset.pattern.permute.xlu0 0
    %50 = vperm.xlu0 %49, %v32
    %v51 = vpop.permute.xlu0 %50
    %v53 = vmul.f32 %v21, %v36
    %v54 = vmul.f32 %v22, %v41
    %v55 = vmul.f32 %v23, %v46
    %v56 = vmul.f32 %v24, %v51
    %v57 = vmul.f32 %v25, %v36
    %v58 = vmul.f32 %v26, %v41
    %v59 = vmul.f32 %v27, %v46
    %v60 = vmul.f32 %v28, %v51
    %v61 = vld [vmem:[%s4] sm:$0x1]
    %v63 = vlaneseq
    %v64 = vshrl.u32 %v63, 7
    %v65 = vsub.s32 0, %v64
    %v66 = vrot.slane %v61, %v65
    %v68 = vadd.f32 %v53, %v66
    %v69 = vadd.f32 %v54, %v66
    %v70 = vadd.f32 %v55, %v66
    %v71 = vadd.f32 %v56, %v66
    %v72 = vadd.f32 %v57, %v66
    %v73 = vadd.f32 %v58, %v66
    %v74 = vadd.f32 %v59, %v66
    %v75 = vadd.f32 %v60, %v66
    %vm76 = vcmask 261120
    %77 = vst.msk [vmem:[#allocation2] sm:$0xff] %vm76, %v68
    %78 = vst.msk [vmem:[#allocation2 + $0x8] sm:$0xff] %vm76, %v69
    %79 = vst.msk [vmem:[#allocation2 + $0x10] sm:$0xff] %vm76, %v70
    %80 = vst.msk [vmem:[#allocation2 + $0x18] sm:$0xff] %vm76, %v71
    %81 = vst.msk [vmem:[#allocation2 + $0x20] sm:$0xff] %vm76, %v72
    %82 = vst.msk [vmem:[#allocation2 + $0x28] sm:$0xff] %vm76, %v73
    %83 = vst.msk [vmem:[#allocation2 + $0x30] sm:$0xff] %vm76, %v74
    %84 = vst.msk [vmem:[#allocation2 + $0x38] sm:$0xff] %vm76, %v75
    %v85 = vld [vmem:[%s2] sm:$0xff]
    %v86 = vld [vmem:[%s2 + $0x8] sm:$0xff]
    %v87 = vld [vmem:[%s2 + $0x10] sm:$0xff]
    %v88 = vld [vmem:[%s2 + $0x18] sm:$0xff]
    %90 = vset.pattern.permute.xlu0 0
    %91 = vperm.xlu0 %90, %v85
    %v92 = vpop.permute.xlu0 %91
    %95 = vset.pattern.permute.xlu0 0
    %96 = vperm.xlu0 %95, %v86
    %v97 = vpop.permute.xlu0 %96
    %100 = vset.pattern.permute.xlu0 0
    %101 = vperm.xlu0 %100, %v87
    %v102 = vpop.permute.xlu0 %101
    %105 = vset.pattern.permute.xlu0 0
    %106 = vperm.xlu0 %105, %v88
    %v107 = vpop.permute.xlu0 %106
    %v109 = vmul.f32 %v21, %v92
    %v110 = vmul.f32 %v22, %v97
    %v111 = vmul.f32 %v23, %v102
    %v112 = vmul.f32 %v24, %v107
    %v113 = vmul.f32 %v25, %v92
    %v114 = vmul.f32 %v26, %v97
    %v115 = vmul.f32 %v27, %v102
    %v116 = vmul.f32 %v28, %v107
    %v117 = vld [vmem:[%s3] sm:$0x1]
    %v119 = vlaneseq
    %v120 = vshrl.u32 %v119, 7
    %v121 = vsub.s32 0, %v120
    %v122 = vrot.slane %v117, %v121
    %v124 = vadd.f32 %v109, %v122
    %v125 = vadd.f32 %v110, %v122
    %v126 = vadd.f32 %v111, %v122
    %v127 = vadd.f32 %v112, %v122
    %v128 = vadd.f32 %v113, %v122
    %v129 = vadd.f32 %v114, %v122
    %v130 = vadd.f32 %v115, %v122
    %v131 = vadd.f32 %v116, %v122
    %140 = vrot.lane.b32.xlu0 %v124, 32
    %v141 = vpop.permute.xlu0 %140
    %142 = vrot.lane.b32.xlu0 %v125, 32
    %v143 = vpop.permute.xlu0 %142
    %144 = vrot.lane.b32.xlu0 %v126, 32
    %v145 = vpop.permute.xlu0 %144
    %146 = vrot.lane.b32.xlu0 %v127, 32
    %v147 = vpop.permute.xlu0 %146
    %148 = vrot.lane.b32.xlu0 %v128, 32
    %v149 = vpop.permute.xlu0 %148
    %150 = vrot.lane.b32.xlu0 %v129, 32
    %v151 = vpop.permute.xlu0 %150
    %152 = vrot.lane.b32.xlu0 %v130, 32
    %v153 = vpop.permute.xlu0 %152
    %154 = vrot.lane.b32.xlu0 %v131, 32
    %v155 = vpop.permute.xlu0 %154
    %vm164 = vcmask 523520
    %165 = vst.msk [vmem:[#allocation2] sm:$0xff] %vm164, %v141
    %166 = vst.msk [vmem:[#allocation2 + $0x8] sm:$0xff] %vm164, %v143
    %167 = vst.msk [vmem:[#allocation2 + $0x10] sm:$0xff] %vm164, %v145
    %168 = vst.msk [vmem:[#allocation2 + $0x18] sm:$0xff] %vm164, %v147
    %169 = vst.msk [vmem:[#allocation2 + $0x20] sm:$0xff] %vm164, %v149
    %170 = vst.msk [vmem:[#allocation2 + $0x28] sm:$0xff] %vm164, %v151
    %171 = vst.msk [vmem:[#allocation2 + $0x30] sm:$0xff] %vm164, %v153
    %172 = vst.msk [vmem:[#allocation2 + $0x38] sm:$0xff] %vm164, %v155
    // Predicated region
    $region22: #{tpu_custom_call.1} parent=1 // pred_check
      _
    $region23: #{tpu_custom_call.1} parent=1 // pred_check_branch
      %174 = sbr.rel (0) target = $region25
    $region24: #{tpu_custom_call.1} parent=1 // pred_region
      %s176 = ssub.s32 1024, 1024
      %177 = vsyncadd [#allocation3], %s176
      %s178 = sshll.u32 [#allocation2], 4
      %s179 = int_to_ptr.vmem [resolvable:$true] %s178
      %184 = dma.vmem_to_hbm [thread:$0]  %s179, 1024, %s5, [#allocation3], 128, 128, 8
    $region25: #{tpu_custom_call.1} parent=1 // pred_fallthru
      _
    // Predicated region
    $region26: #{tpu_custom_call.1} parent=1 // pred_check
      _
    $region27: #{tpu_custom_call.1} parent=1 // pred_check_branch
      %186 = sbr.rel (0) target = $region29
    $region28: #{tpu_custom_call.1} parent=1 // pred_region
      %187 = dma.done [#allocation3], 1024
    $region29: #{tpu_custom_call.1} parent=1 // pred_fallthru
      _
    %188 = vsyncpa [#allocation3], 1

</llo_original>
